<compile_context>
chip_gen: v5e
topology: v5e:2x2
jax: 0.10.0
libtpu: 0.0.40
codegen_flags: <defaults>
</compile_context>

<pallas_src>
import jax
import jax.numpy as jnp
from jax.experimental import pallas as pl
from jax.experimental.pallas import tpu as pltpu

# wrapped `model` instantiated as Conv2d(C_IN -> C_OUT, 3x3, stride 1, pad 1)
C_IN, C_OUT, KH, KW = 4, 8, 3, 3


# ----------------------------- Pallas kernel -------------------------------
def _make_qconv_kernel(nb, h, nout, m, s_o, lo, hi):
    """Kernel factory: shapes and requant scalars are compile-time constants.

    Per grid step the kernel sees NB whole padded, quantized images (rows
    flattened to (W+2)*Cin lanes) and writes NB*H lane-dense output rows of
    W*Cout (=128) lanes.  im2col happens in-kernel: the conv is the sum over
    dh of a row-shifted matmul with a banded weight matrix.
    """

    def kernel(x_ref, w_ref, fb_ref, o_ref):
        # x_ref : (NB, H+2, (W+2)*Cin)   bf16 quantized input (ints 0..255, exact)
        # w_ref : (KH, (W+2)*Cin, W*Cout) bf16 banded quantized weights (ints)
        # fb_ref: (1, W*Cout) f32 fused bias  (b - s_x*s_w*z_x*colsum(w_q)) / s_o
        # o_ref : (NB, H, W*Cout) bf16 dequantized output
        acc = jnp.zeros((nb * h, nout), jnp.float32)
        for dh in range(KH):
            if nb == 1:
                xs = x_ref[0, dh:dh + h, :]
            else:
                xs = jnp.concatenate(
                    [x_ref[b, dh:dh + h, :] for b in range(nb)], axis=0)
            # Integer-exact bf16 MXU matmul with f32 accumulation:
            # at most 36 nonzero taps per output, |qx|<=255, |w_q|<=127
            # -> |acc| < 2^24, so the accumulation is exact.
            acc = acc + jnp.dot(xs, w_ref[dh], preferred_element_type=jnp.float32)
        # Requantize (folded multiplier), clip to the quint8 range shifted by
        # -z_o (lo=-z_o, hi=255-z_o), then DeQuantStub (one mul by s_o).
        t = jnp.clip(jnp.round(acc * m + fb_ref[...]), lo, hi)
        o_ref[...] = (t * s_o).astype(o_ref.dtype).reshape(nb, h, nout)

    return kernel


# ------------------------------ glue (JAX) ---------------------------------
def _affine_qparams_u8(t):
    """MinMaxObserver-style per-tensor affine quint8 params (range spans 0)."""
    tmin = jnp.minimum(jnp.min(t), 0.0)
    tmax = jnp.maximum(jnp.max(t), 0.0)
    scale = jnp.maximum((tmax - tmin) / 255.0, 1e-8)
    zp = jnp.clip(jnp.round(-tmin / scale), 0.0, 255.0)
    return scale, zp


def _sym_scale_i8(w):
    """Per-tensor symmetric qint8 scale for weights (zero_point = 0)."""
    return jnp.maximum(jnp.max(jnp.abs(w)) / 127.0, 1e-8)


def _im2col(xp_nhwc, H, W):
    """3x3 / stride 1 im2col on a spatially padded NHWC tensor.
    Used only for calibration and the pure-JAX reference (never in the
    jitted forward path)."""
    Cin = xp_nhwc.shape[-1]
    cols = [xp_nhwc[:, di:di + H, dj:dj + W, :] for di in range(KH) for dj in range(KW)]
    return jnp.concatenate(cols, axis=-1).reshape(-1, KH * KW * Cin)


def _pick_images_per_step(n, h):
    """NB whole images per grid step: ~1024 output rows/step, grid >= 2 steps
    (v7x megacore), NB a divisor of N so no batch padding is ever needed."""
    cap = max(1, 1024 // max(h, 1))
    nb = 1
    for d in range(1, n + 1):
        if n % d == 0 and d <= cap and (n // d) >= min(2, n):
            nb = d
    return nb


def calibrate(x, w, b):
    """One-time PTQ calibration (PyTorch: observer pass + convert()).
    All observer math, the calibration GEMM for the output observer, the banded
    weight-matrix construction and the requant constant folding live here —
    none of it runs in the jitted forward path.
    TODO(synk): PyTorch observers accumulate stats over a calibration set; here
    they are calibrated on the single example input."""
    N, Cin, H, W = x.shape

    s_x, z_x = _affine_qparams_u8(x)

    # [Cout, Cin, kh, kw] -> [kh, kw, Cin, Cout]
    w_khwc = jnp.transpose(w, (2, 3, 1, 0))
    w_mat = w_khwc.reshape(KH * KW * Cin, C_OUT)
    s_w = _sym_scale_i8(w_mat)
    # TODO(synk): torch qint8 symmetric range is [-128,127]; [-127,127] used here.
    w_q4 = jnp.clip(jnp.round(w_khwc / s_w), -127.0, 127.0)        # (KH,KW,Cin,Cout)
    w_qmat = w_q4.reshape(KH * KW * Cin, C_OUT)

    # output observer on the float conv output (calibration-only GEMM)
    x_nhwc = jnp.transpose(x, (0, 2, 3, 1))
    xp = jnp.pad(x_nhwc, ((0, 0), (1, 1), (1, 1), (0, 0)))
    y_float = _im2col(xp, H, W) @ w_mat + b[None, :]
    s_o, z_o = _affine_qparams_u8(y_float)

    # ---- banded weight matrices for in-kernel im2col (depend on W) ----
    #   W_dh[(wcol+dw)*Cin + ci, wcol*Cout + co] = w_q[dh, dw, ci, co]
    shift = [jnp.zeros((W + 2, W), jnp.float32)
             .at[jnp.arange(W) + dw, jnp.arange(W)].set(1.0) for dw in range(KW)]
    w_mats = jnp.stack(
        [sum(jnp.kron(shift[dw], w_q4[dh, dw]) for dw in range(KW)) for dh in range(KH)]
    ).astype(jnp.bfloat16)                                          # (KH,(W+2)*Cin,W*Cout)

    # ---- fold inference-time constants ----
    #   y/s_o = acc*(s_x*s_w/s_o) + (b - s_x*s_w*z_x*colsum(w_q))/s_o
    s_xw = s_x * s_w
    fused = (b - s_xw * z_x * jnp.sum(w_qmat, axis=0)) / s_o        # (Cout,)
    fb = jnp.tile(fused, (W,)).reshape(1, W * C_OUT).astype(jnp.float32)

    consts = dict(inv_s_x=float(1.0 / s_x), z_x=float(z_x),
                  m=float(s_xw / s_o), s_o=float(s_o),
                  lo=float(-z_o), hi=float(255.0 - z_o))
    params = dict(w_mats=w_mats, fb=fb, consts=consts)
    raw = dict(s_x=s_x, z_x=z_x, s_w=s_w, w_q=w_qmat, s_o=s_o, z_o=z_o)
    return params, raw


def make_forward(params):
    """Build the jitted forward pass with frozen (compile-time) qparams."""
    c = params["consts"]
    inv_s_x, z_x = c["inv_s_x"], c["z_x"]
    m, s_o, lo, hi = c["m"], c["s_o"], c["lo"], c["hi"]

    @jax.jit
    def forward(x, w_mats, fb):
        N, Cin, H, W = x.shape
        krow = (W + 2) * Cin
        nout = W * C_OUT

        # --- QuantStub: quantize once (ints 0..255 exact in bf16), THEN pad
        # spatially with the zero point (pads dequantize exactly to 0.0).
        x_nhwc = jnp.transpose(x, (0, 2, 3, 1))
        qx = jnp.clip(jnp.round(x_nhwc * inv_s_x) + z_x, 0.0, 255.0).astype(jnp.bfloat16)
        qxp = jnp.pad(qx, ((0, 0), (1, 1), (1, 1), (0, 0)), constant_values=z_x)
        qxp_rows = qxp.reshape(N, H + 2, krow)          # contiguous reshape: free

        nb = _pick_images_per_step(N, H)
        kernel = _make_qconv_kernel(nb, H, nout, m, s_o, lo, hi)

        out_rows = pl.pallas_call(
            kernel,
            out_shape=jax.ShapeDtypeStruct((N, H, nout), jnp.bfloat16),
            grid=(N // nb,),
            in_specs=[
                pl.BlockSpec((nb, H + 2, krow), lambda i: (i, 0, 0)),   # quantized rows
                pl.BlockSpec((KH, krow, nout), lambda i: (0, 0, 0)),    # banded q-weights
                pl.BlockSpec((1, nout), lambda i: (0, 0)),              # fused bias / s_o
            ],
            out_specs=pl.BlockSpec((nb, H, nout), lambda i: (i, 0, 0)), # 128-lane dense bf16
            compiler_params=pltpu.CompilerParams(
                dimension_semantics=("parallel",)),
        )(qxp_rows, w_mats, fb)

        # free reshape; one fused bf16 transpose + f32 cast back to NCHW
        # (DeQuantStub returns float; NCHW kept for module-output fidelity).
        out = out_rows.reshape(N, H, W, C_OUT)
        return jnp.transpose(out, (0, 3, 1, 2)).astype(jnp.float32)

    return lambda x: forward(x, params["w_mats"], params["fb"])


def reference_forward(x, w, b, raw):
    """Pure-JAX reference with identical quantization math (no Pallas)."""
    N, Cin, H, W = x.shape
    s_x, z_x, s_w, w_q, s_o, z_o = (raw[k] for k in ("s_x", "z_x", "s_w", "w_q", "s_o", "z_o"))
    x_nhwc = jnp.transpose(x, (0, 2, 3, 1))
    xp = jnp.pad(x_nhwc, ((0, 0), (1, 1), (1, 1), (0, 0)))
    qxp = jnp.clip(jnp.round(xp / s_x) + z_x, 0.0, 255.0)            # f32, exact ints
    patches = _im2col(qxp, H, W)
    acc = patches @ w_q
    y = (s_x * s_w) * (acc - z_x * jnp.sum(w_q, axis=0)[None, :]) + b[None, :]
    qy = jnp.clip(jnp.round(y / s_o) + z_o, 0.0, 255.0)
    out = ((qy - z_o) * s_o).reshape(N, H, W, C_OUT)
    return jnp.transpose(out, (0, 3, 1, 2)), float(s_o)


if __name__ == "__main__":
    key = jax.random.PRNGKey(0)
    kx, kw_, kb = jax.random.split(key, 3)

    N, H, W = 2, 16, 16
    x = jax.random.normal(kx, (N, C_IN, H, W), dtype=jnp.float32)
    w = jax.random.normal(kw_, (C_OUT, C_IN, KH, KW), dtype=jnp.float32) * 0.1
    b = jax.random.normal(kb, (C_OUT,), dtype=jnp.float32) * 0.1

    params, raw = calibrate(x, w, b)
    forward = make_forward(params)
    y = jax.block_until_ready(forward(x))

    y_ref, s_o = reference_forward(x, w, b, raw)
    assert y.shape == (N, C_OUT, H, W), y.shape
    max_err = float(jnp.max(jnp.abs(y - y_ref)))
    # Slack budget (intentional, documented):
    #   <= 1 output quantization step from the folded-multiplier rounding order
    #   <= 1 output quantization step from the bf16 kernel-output cast
    assert max_err <= 2.0 * s_o + 1e-4, f"max_err={max_err}, s_o={s_o}"

    print("KERNEL_OK")
</pallas_src>

<mosaic_0001>
module attributes {stable_mosaic.version = 11 : i64} {
  func.func @kernel(%arg0: i32, %arg1: memref<1x18x72xbf16, #tpu.memory_space<vmem>>, %arg2: memref<3x72x128xbf16, #tpu.memory_space<vmem>>, %arg3: memref<1x128xf32, #tpu.memory_space<vmem>>, %arg4: memref<1x16x128xbf16, #tpu.memory_space<vmem>>) attributes {dimension_semantics = [#tpu.dimension_semantics<parallel>], iteration_bounds = array<i64: 2>, scalar_prefetch = 0 : i64, scratch_operands = 0 : i64, tpu.core_type = #tpu.core_type<tc>, window_params = [{transform_indices = @transform_0, window_bounds = array<i64: 1, 18, 72>}, {pipeline_mode = #tpu.pipeline_mode<synchronous>, transform_indices = @transform_1, window_bounds = array<i64: 3, 72, 128>}, {pipeline_mode = #tpu.pipeline_mode<synchronous>, transform_indices = @transform_2, window_bounds = array<i64: 1, 128>}, {transform_indices = @transform_3, window_bounds = array<i64: 1, 16, 128>}]} {
    %cst = arith.constant 0.000000e+00 : f32
    %0 = vector.broadcast %cst : f32 to vector<16x128xf32>
    %c0 = arith.constant 0 : index
    %c0_0 = arith.constant 0 : index
    %c0_1 = arith.constant 0 : index
    %1 = vector.load %arg1[%c0, %c0_0, %c0_1] : memref<1x18x72xbf16, #tpu.memory_space<vmem>>, vector<1x16x72xbf16>
    %2 = vector.shape_cast %1 : vector<1x16x72xbf16> to vector<16x72xbf16>
    %c0_2 = arith.constant 0 : index
    %c0_3 = arith.constant 0 : index
    %c0_4 = arith.constant 0 : index
    %3 = vector.load %arg2[%c0_2, %c0_3, %c0_4] : memref<3x72x128xbf16, #tpu.memory_space<vmem>>, vector<1x72x128xbf16>
    %4 = vector.shape_cast %3 : vector<1x72x128xbf16> to vector<72x128xbf16>
    %cst_5 = arith.constant dense<0.000000e+00> : vector<16x128xf32>
    %5 = tpu.matmul %2, %4, %cst_5 {dimension_numbers = #tpu.dot_dimension_numbers<[1], [0], [0], [1], [0, 0, 1, 1], [], []>} : vector<16x72xbf16>, vector<72x128xbf16>, vector<16x128xf32> -> vector<16x128xf32>
    %6 = arith.addf %0, %5 : vector<16x128xf32>
    %c0_6 = arith.constant 0 : index
    %c1 = arith.constant 1 : index
    %c0_7 = arith.constant 0 : index
    %7 = vector.load %arg1[%c0_6, %c1, %c0_7] : memref<1x18x72xbf16, #tpu.memory_space<vmem>>, vector<1x16x72xbf16>
    %8 = vector.shape_cast %7 : vector<1x16x72xbf16> to vector<16x72xbf16>
    %c1_8 = arith.constant 1 : index
    %c0_9 = arith.constant 0 : index
    %c0_10 = arith.constant 0 : index
    %9 = vector.load %arg2[%c1_8, %c0_9, %c0_10] : memref<3x72x128xbf16, #tpu.memory_space<vmem>>, vector<1x72x128xbf16>
    %10 = vector.shape_cast %9 : vector<1x72x128xbf16> to vector<72x128xbf16>
    %cst_11 = arith.constant dense<0.000000e+00> : vector<16x128xf32>
    %11 = tpu.matmul %8, %10, %cst_11 {dimension_numbers = #tpu.dot_dimension_numbers<[1], [0], [0], [1], [0, 0, 1, 1], [], []>} : vector<16x72xbf16>, vector<72x128xbf16>, vector<16x128xf32> -> vector<16x128xf32>
    %12 = arith.addf %6, %11 : vector<16x128xf32>
    %c0_12 = arith.constant 0 : index
    %c2 = arith.constant 2 : index
    %c0_13 = arith.constant 0 : index
    %13 = vector.load %arg1[%c0_12, %c2, %c0_13] : memref<1x18x72xbf16, #tpu.memory_space<vmem>>, vector<1x16x72xbf16>
    %14 = vector.shape_cast %13 : vector<1x16x72xbf16> to vector<16x72xbf16>
    %c2_14 = arith.constant 2 : index
    %c0_15 = arith.constant 0 : index
    %c0_16 = arith.constant 0 : index
    %15 = vector.load %arg2[%c2_14, %c0_15, %c0_16] : memref<3x72x128xbf16, #tpu.memory_space<vmem>>, vector<1x72x128xbf16>
    %16 = vector.shape_cast %15 : vector<1x72x128xbf16> to vector<72x128xbf16>
    %cst_17 = arith.constant dense<0.000000e+00> : vector<16x128xf32>
    %17 = tpu.matmul %14, %16, %cst_17 {dimension_numbers = #tpu.dot_dimension_numbers<[1], [0], [0], [1], [0, 0, 1, 1], [], []>} : vector<16x72xbf16>, vector<72x128xbf16>, vector<16x128xf32> -> vector<16x128xf32>
    %18 = arith.addf %12, %17 : vector<16x128xf32>
    %cst_18 = arith.constant 0.00420873705 : f32
    %19 = vector.broadcast %cst_18 : f32 to vector<16x128xf32>
    %20 = arith.mulf %18, %19 : vector<16x128xf32>
    %c0_19 = arith.constant 0 : index
    %c0_20 = arith.constant 0 : index
    %21 = vector.load %arg3[%c0_19, %c0_20] : memref<1x128xf32, #tpu.memory_space<vmem>>, vector<1x128xf32>
    %22 = vector.broadcast %21 : vector<1x128xf32> to vector<16x128xf32>
    %23 = arith.addf %20, %22 : vector<16x128xf32>
    %24 = math.roundeven %23 : vector<16x128xf32>
    %cst_21 = arith.constant -1.280000e+02 : f32
    %cst_22 = arith.constant 1.270000e+02 : f32
    %25 = vector.broadcast %cst_21 : f32 to vector<16x128xf32>
    %26 = arith.maximumf %25, %24 : vector<16x128xf32>
    %27 = vector.broadcast %cst_22 : f32 to vector<16x128xf32>
    %28 = arith.minimumf %27, %26 : vector<16x128xf32>
    %cst_23 = arith.constant 0.0170243848 : f32
    %29 = vector.broadcast %cst_23 : f32 to vector<16x128xf32>
    %30 = arith.mulf %28, %29 : vector<16x128xf32>
    %31 = arith.truncf %30 : vector<16x128xf32> to vector<16x128xbf16>
    %32 = vector.shape_cast %31 : vector<16x128xbf16> to vector<1x16x128xbf16>
    %c0_24 = arith.constant 0 : index
    %c0_25 = arith.constant 0 : index
    %c0_26 = arith.constant 0 : index
    %33 = vector.load %arg4[%c0_24, %c0_25, %c0_26] : memref<1x16x128xbf16, #tpu.memory_space<vmem>>, vector<1x16x128xbf16>
    tpu.vector_store %arg4[%c0_24, %c0_25, %c0_26], %32 {strides = array<i32>} : memref<1x16x128xbf16, #tpu.memory_space<vmem>>, vector<1x16x128xbf16>,
    return
  }
  func.func @transform_0(%arg0: i32) -> (i32, i32, i32) {
    %c0_i32 = arith.constant 0 : i32
    %c0_i32_0 = arith.constant 0 : i32
    %c0_i32_1 = arith.constant 0 : i32
    return %arg0, %c0_i32, %c0_i32_0 : i32, i32, i32
  }
  func.func @transform_1(%arg0: i32) -> (i32, i32, i32) {
    %c0_i32 = arith.constant 0 : i32
    %c0_i32_0 = arith.constant 0 : i32
    %c0_i32_1 = arith.constant 0 : i32
    %c0_i32_2 = arith.constant 0 : i32
    return %c0_i32, %c0_i32_0, %c0_i32_1 : i32, i32, i32
  }
  func.func @transform_2(%arg0: i32) -> (i32, i32) {
    %c0_i32 = arith.constant 0 : i32
    %c0_i32_0 = arith.constant 0 : i32
    %c0_i32_1 = arith.constant 0 : i32
    return %c0_i32, %c0_i32_0 : i32, i32
  }
  func.func @transform_3(%arg0: i32) -> (i32, i32, i32) {
    %c0_i32 = arith.constant 0 : i32
    %c0_i32_0 = arith.constant 0 : i32
    %c0_i32_1 = arith.constant 0 : i32
    return %arg0, %c0_i32, %c0_i32_0 : i32, i32, i32
  }
}

</mosaic_0001>

<llo_original>
// kernel: forward.1
$region0: #{forward.1}
  #allocation0 [shape = 'u32[]', space=smem, size = 0x4, offset = 0x4, fixed_abs, tag = 'smem constant byte address 0x4 - core index']
  #allocation1 [shape = 'u32[72,128]{1,0:T(1,128)}', space=vmem, size = 0x9000, scoped, tag = 'internal scratch']
  %s0 = inlined_call_operand.vmem [shape: bf16[2,18,72], index: 0, kind: input, shape index: {}]
  %s1 = inlined_call_operand.vmem [shape: bf16[3,72,128], index: 1, kind: input, shape index: {}]
  %s2 = inlined_call_operand.vmem [shape: f32[1,128], index: 2, kind: input, shape index: {}]
  %s3 = inlined_call_operand.vmem [shape: bf16[2,16,128], index: 3, kind: output, shape index: {}]
  %s4 = sld [smem:[#allocation0]]
  $region45: #{forward.1} parent=0
    _
  %s6 = ssub.s32 1, %s4
  %s7 = scalar_select 0, %s6, %s4
  loop: start=0, step=1, limit=4
  $region2: #{forward.1} parent=0 // loop_pre_header
    _
  $region3: #{forward.1} parent=0 // loop_header
    %s9 = sphi 0, %s13
    %p10 = scmp.ge.s32.totalorder %s9, 4
    %s19 = sphi 0, %s21
    %s22 = sphi 0, %s19
    %s23 = sphi 0, %s22
    %s39 = sphi 0, %s23
    %s43 = sphi 0, %s43
    %s45 = sphi 0, %s43
    %s46 = sphi 0, %s45
    %s60 = sphi 0, %s46
    %s64 = sphi 0, %s64
    %s66 = sphi 0, %s64
    %s67 = sphi 0, %s66
    %s81 = sphi 0, %s67
    %s87 = sphi 0, %s89
    %s90 = sphi 0, %s87
    %s91 = sphi 0, %s90
    %s107 = sphi 0, %s91
  $region4: #{forward.1} parent=0 // loop_header_branch
    %12 = sbr.rel (%p10) target = $region8
  $region5: #{forward.1} parent=0 // loop_body
    %s14 = ssub.s32 %s9, 1
    %s15 = ssub.s32 %s9, 2
    %s16 = sadd.s32 %s9, 1
    %s17 = ssub.s32 %s9, %s16
    %p18 = scmp.eq.s32.totalorder %s17, 0
    %s20 = sadd.s32 %s19, 1
    %s21 = scalar_select %p18, %s19, %s20
    %p24 = pneg %p18
    %p25 = scmp.eq.s32.totalorder %s9, 1
    %p26 = por %p24, %p25
    %p27 = scmp.ne.s32.totalorder %s19, %s22
    %p28 = scmp.eq.s32.totalorder %s9, 0
    %p29 = por %p27, %p28
    %p30 = scmp.ne.s32.totalorder %s19, %s22
    %p31 = scmp.eq.s32.totalorder %s14, 1
    %p32 = por %p30, %p31
    %p33 = scmp.ne.s32.totalorder %s22, %s23
    %p34 = scmp.eq.s32.totalorder %s14, 0
    %p35 = por %p33, %p34
    %p36 = scmp.ne.s32.totalorder %s22, %s23
    %p37 = scmp.eq.s32.totalorder %s15, 1
    %p38 = por %p36, %p37
    %p40 = scmp.ne.s32.totalorder %s23, %s39
    %p41 = scmp.eq.s32.totalorder %s15, 0
    %p42 = por %p40, %p41
    %s44 = sadd.s32 %s43, 1
    %p47 = scmp.eq.s32.totalorder %s9, 1
    %p48 = scmp.ne.s32.totalorder %s43, %s45
    %p49 = scmp.eq.s32.totalorder %s9, 0
    %p50 = por %p48, %p49
    %p51 = scmp.ne.s32.totalorder %s43, %s45
    %p52 = scmp.eq.s32.totalorder %s14, 1
    %p53 = por %p51, %p52
    %p54 = scmp.ne.s32.totalorder %s45, %s46
    %p55 = scmp.eq.s32.totalorder %s14, 0
    %p56 = por %p54, %p55
    %p57 = scmp.ne.s32.totalorder %s45, %s46
    %p58 = scmp.eq.s32.totalorder %s15, 1
    %p59 = por %p57, %p58
    %p61 = scmp.ne.s32.totalorder %s46, %s60
    %p62 = scmp.eq.s32.totalorder %s15, 0
    %p63 = por %p61, %p62
    %s65 = sadd.s32 %s64, 1
    %p68 = scmp.eq.s32.totalorder %s9, 1
    %p69 = scmp.ne.s32.totalorder %s64, %s66
    %p70 = scmp.eq.s32.totalorder %s9, 0
    %p71 = por %p69, %p70
    %p72 = scmp.ne.s32.totalorder %s64, %s66
    %p73 = scmp.eq.s32.totalorder %s14, 1
    %p74 = por %p72, %p73
    %p75 = scmp.ne.s32.totalorder %s66, %s67
    %p76 = scmp.eq.s32.totalorder %s14, 0
    %p77 = por %p75, %p76
    %p78 = scmp.ne.s32.totalorder %s66, %s67
    %p79 = scmp.eq.s32.totalorder %s15, 1
    %p80 = por %p78, %p79
    %p82 = scmp.ne.s32.totalorder %s67, %s81
    %p83 = scmp.eq.s32.totalorder %s15, 0
    %p84 = por %p82, %p83
    %s85 = ssub.s32 %s9, %s16
    %p86 = scmp.eq.s32.totalorder %s85, 0
    %s88 = sadd.s32 %s87, 1
    %s89 = scalar_select %p86, %s87, %s88
    %p92 = pneg %p86
    %p93 = scmp.eq.s32.totalorder %s9, 1
    %p94 = por %p92, %p93
    %p95 = scmp.ne.s32.totalorder %s87, %s90
    %p96 = scmp.eq.s32.totalorder %s9, 0
    %p97 = por %p95, %p96
    %p98 = scmp.ne.s32.totalorder %s87, %s90
    %p99 = scmp.eq.s32.totalorder %s14, 1
    %p100 = por %p98, %p99
    %p101 = scmp.ne.s32.totalorder %s90, %s91
    %p102 = scmp.eq.s32.totalorder %s14, 0
    %p103 = por %p101, %p102
    %p104 = scmp.ne.s32.totalorder %s90, %s91
    %p105 = scmp.eq.s32.totalorder %s15, 1
    %p106 = por %p104, %p105
    %p108 = scmp.ne.s32.totalorder %s91, %s107
    %p109 = scmp.eq.s32.totalorder %s15, 0
    %p110 = por %p108, %p109
    %p111 = scmp.le.s32.totalorder 1, %s9
    %p112 = scmp.lt.s32.totalorder %s9, 3
    %p113 = pnand %p111, %p112
    %p114 = pneg %p113
    // Predicated region
    $region9: #{forward.1} parent=5 // pred_check
      _
    $region10: #{forward.1} parent=5 // pred_check_branch
      %116 = sbr.rel (%p113) target = $region12
    $region11: #{forward.1} parent=5 // pred_region
      %s117 = ssub.s32 %s9, 1
      // Predicated region
      $region13: #{forward.1} parent=11 // pred_check
        %p118 = pneg %p56
      $region14: #{forward.1} parent=11 // pred_check_branch
        %120 = sbr.rel (%p118) target = $region16
      $region15: #{forward.1} parent=11 // pred_region
        _
      $region16: #{forward.1} parent=11 // pred_fallthru
        _
      // Predicated region
      $region17: #{forward.1} parent=11 // pred_check
        %p121 = pneg %p77
      $region18: #{forward.1} parent=11 // pred_check_branch
        %123 = sbr.rel (%p121) target = $region20
      $region19: #{forward.1} parent=11 // pred_region
        _
      $region20: #{forward.1} parent=11 // pred_fallthru
        _
    $region12: #{forward.1} parent=5 // pred_fallthru
      _
    %p124 = scmp.lt.s32.totalorder %s9, 2
    // Predicated region
    $region21: #{forward.1} parent=5 // pred_check
      %p125 = pneg %p124
    $region22: #{forward.1} parent=5 // pred_check_branch
      %127 = sbr.rel (%p125) target = $region24
    $region23: #{forward.1} parent=5 // pred_region
      // Predicated region
      $region25: #{forward.1} parent=23 // pred_check
        %p128 = pneg %p29
      $region26: #{forward.1} parent=23 // pred_check_branch
        %130 = sbr.rel (%p128) target = $region28
      $region27: #{forward.1} parent=23 // pred_region
        %p131 = scmp.lt.s32.totalorder %s9, 1
        %s132 = scalar_select %p131, %s9, 1
        %s133 = smul.addr %s132, 3
        %s134 = smul.addr %s133, 4
        %s135 = scalar_lea.vmem %s0, %s134
      $region28: #{forward.1} parent=23 // pred_fallthru
        _
    $region24: #{forward.1} parent=5 // pred_fallthru
      _
    %p136 = scmp.le.s32.totalorder 1, %s9
    %p137 = scmp.lt.s32.totalorder %s9, 3
    %p138 = pnand %p136, %p137
    %p139 = pneg %p138
    // Predicated region
    $region29: #{forward.1} parent=5 // pred_check
      _
    $region30: #{forward.1} parent=5 // pred_check_branch
      %141 = sbr.rel (%p138) target = $region32
    $region31: #{forward.1} parent=5 // pred_region
      %s142 = ssub.s32 %s9, 1
      %p143 = scmp.lt.s32.totalorder %s14, 1
      %s144 = scalar_select %p143, %s14, 1
      %s145 = smul.addr %s144, 3
      %s146 = smul.addr %s145, 4
      %s147 = scalar_lea.vmem %s0, %s146
      %p148 = pneg %p35
      %p149 = pneg %p32
      %p150 = pneg %p56
      %p151 = pneg %p53
      %p152 = pneg %p77
      %p153 = pneg %p74
      %p154 = pneg %p103
      %p155 = pneg %p100
      %p156 = scmp.lt.s32.totalorder %s14, 1
      %s157 = scalar_select %p156, %s14, 1
      %s158 = smul.addr %s157, 2
      %s159 = smul.addr %s158, 4
      %s160 = scalar_lea.vmem %s3, %s159
      %p161 = scmp.lt.s32.totalorder %s14, 1
      %s162 = scalar_select %p161, %s14, 1
      %s163 = smul.addr %s162, 3
      %s164 = smul.addr %s163, 4
      %s165 = scalar_lea.vmem %s0, %s164
      %p166 = scmp.lt.s32.totalorder %s14, 1
      %s167 = scalar_select %p166, %s14, 1
      %s168 = smul.addr %s167, 2
      %s169 = smul.addr %s168, 4
      %s170 = scalar_lea.vmem %s3, %s169
      %v172 = vld [vmem:[%s165] sm:$0xf]
      %v173 = vld [vmem:[%s165 + $0x4] sm:$0xf]
      %v174 = vld [vmem:[%s1] sm:$0xf]
      %v175 = vld [vmem:[%s1 + $0x4] sm:$0xf]
      %v176 = vld [vmem:[%s1 + $0x8] sm:$0xf]
      %v177 = vld [vmem:[%s1 + $0xc] sm:$0xf]
      %v178 = vld [vmem:[%s1 + $0x10] sm:$0xf]
      %v179 = vld [vmem:[%s1 + $0x14] sm:$0xf]
      %v180 = vld [vmem:[%s1 + $0x18] sm:$0xf]
      %v181 = vld [vmem:[%s1 + $0x1c] sm:$0xf]
      %v182 = vld [vmem:[%s1 + $0x20] sm:$0xf]
      %v183 = vld [vmem:[%s165 + $0x8] sm:$0x1]
      %s184 = scalar_lea.vmem %s1, 36
      %v185 = vld [vmem:[%s184] sm:$0xf]
      %v186 = vld [vmem:[%s184 + $0x4] sm:$0xf]
      %v187 = vld [vmem:[%s184 + $0x8] sm:$0xf]
      %v188 = vld [vmem:[%s184 + $0xc] sm:$0xf]
      %v189 = vld [vmem:[%s184 + $0x10] sm:$0xf]
      %v190 = vld [vmem:[%s184 + $0x14] sm:$0xf]
      %v191 = vld [vmem:[%s184 + $0x18] sm:$0xf]
      %v192 = vld [vmem:[%s184 + $0x1c] sm:$0xf]
      %v193 = vld [vmem:[%s184 + $0x20] sm:$0xf]
      %v197 = vunpack.c.l.b16 %v172
      %v198 = vunpack.c.l.b16 %v173
      %v199 = vunpack.c.l.b16 %v183
      %v200 = vpack.c.b16 %v198, %v197
      %v201 = vpack.c.b16 %v199, %v199
      %vm202 = vsmask.f32 7424
      %v204 = vshrl.u32 %v200, 16
      %v206 = vshll.u32 %v200, 16
      %v208 = vrot.slane %v206, 1
      %v209 = vor.u32 %v204, %v208
      %v211 = vshll.u32 %v201, 16
      %v213 = vrot.slane %v211, 1
      %v214 = vsel %vm202, %v209, %v213
      %v224 = vunpack.c.l.b16 %v185
      %v225 = vunpack.c.l.b16 %v186
      %v226 = vunpack.c.l.b16 %v187
      %v227 = vunpack.c.l.b16 %v188
      %v228 = vunpack.c.l.b16 %v189
      %v229 = vunpack.c.l.b16 %v190
      %v230 = vunpack.c.l.b16 %v191
      %v231 = vunpack.c.l.b16 %v192
      %v232 = vunpack.c.l.b16 %v193
      %v233 = vpack.c.b16 %v225, %v224
      %v234 = vpack.c.b16 %v227, %v226
      %v235 = vpack.c.b16 %v229, %v228
      %v236 = vpack.c.b16 %v231, %v230
      %v237 = vpack.c.b16 %v232, %v232
      %vm242 = vcmask 588800
      %v244 = vsel %vm242, %v214, 0
      %vm246 = vcmask 1043456
      %v248 = vsel %vm246, %v237, 0
      %250 = vmatpush.bf16.msra.mxu0 0
      %251 = vmatpush.bf16.msra.mxu0 0
      %252 = vmatpush.bf16.msra.mxu0 0
      %253 = vmatpush.bf16.msra.mxu0 %v248
      %254 = vmatpush.bf16.msra.mxu0 %v236
      %255 = vmatpush.bf16.msra.mxu0 %v235
      %256 = vmatpush.bf16.msra.mxu0 %v234
      %257 = vmatpush.bf16.msra.mxu0 %v233
      %258 = vmatmul.bf16.gmra.mxu0 %v244
      %v259 = vpop.f32.mrf.mxu0
      %v260 = vadd.f32 0.0, %v259
      %v261 = vpop.f32.mrf.mxu0
      %v262 = vadd.f32 0.0, %v261
      %263 = vdwg.mxu0
      %v273 = vunpack.c.l.b16 %v174
      %v274 = vunpack.c.l.b16 %v175
      %v275 = vunpack.c.l.b16 %v176
      %v276 = vunpack.c.l.b16 %v177
      %v277 = vunpack.c.l.b16 %v178
      %v278 = vunpack.c.l.b16 %v179
      %v279 = vunpack.c.l.b16 %v180
      %v280 = vunpack.c.l.b16 %v181
      %v281 = vunpack.c.l.b16 %v182
      %v282 = vpack.c.b16 %v274, %v273
      %v283 = vpack.c.b16 %v276, %v275
      %v284 = vpack.c.b16 %v278, %v277
      %v285 = vpack.c.b16 %v280, %v279
      %v286 = vpack.c.b16 %v281, %v281
      %v291 = vsel %vm242, %v200, 0
      %v294 = vsel %vm246, %v286, 0
      %296 = vmatpush.bf16.msra.mxu0 0
      %297 = vmatpush.bf16.msra.mxu0 0
      %298 = vmatpush.bf16.msra.mxu0 0
      %299 = vmatpush.bf16.msra.mxu0 %v294
      %300 = vmatpush.bf16.msra.mxu0 %v285
      %301 = vmatpush.bf16.msra.mxu0 %v284
      %302 = vmatpush.bf16.msra.mxu0 %v283
      %303 = vmatpush.bf16.msra.mxu0 %v282
      %304 = vmatmul.bf16.gmra.mxu0 %v291
      %v305 = vpop.f32.mrf.mxu0
      %v306 = vadd.f32 %v260, %v305
      %v307 = vpop.f32.mrf.mxu0
      %v308 = vadd.f32 %v262, %v307
      %309 = vdwg.mxu0
      %v310 = vld [vmem:[%s165] sm:$0xe]
      %s311 = scalar_lea.vmem %s1, 72
      %v312 = vld [vmem:[%s311] sm:$0xf]
      %v313 = vld [vmem:[%s311 + $0x4] sm:$0xf]
      %v314 = vld [vmem:[%s311 + $0x8] sm:$0xf]
      %v315 = vld [vmem:[%s311 + $0xc] sm:$0xf]
      %v316 = vld [vmem:[%s311 + $0x10] sm:$0xf]
      %v317 = vld [vmem:[%s311 + $0x14] sm:$0xf]
      %v318 = vld [vmem:[%s311 + $0x18] sm:$0xf]
      %v319 = vld [vmem:[%s311 + $0x1c] sm:$0xf]
      %v320 = vld [vmem:[%s311 + $0x20] sm:$0xf]
      %v322 = vunpack.c.l.b16 %v310
      %v323 = vpack.c.b16 %v198, %v322
      %vm324 = vcmask 1046528
      %v325 = vrot.slane %v323, 1
      %v326 = vrot.slane %v201, 1
      %v327 = vsel %vm324, %v325, %v326
      %v337 = vunpack.c.l.b16 %v312
      %v338 = vunpack.c.l.b16 %v313
      %v339 = vunpack.c.l.b16 %v314
      %v340 = vunpack.c.l.b16 %v315
      %v341 = vunpack.c.l.b16 %v316
      %v342 = vunpack.c.l.b16 %v317
      %v343 = vunpack.c.l.b16 %v318
      %v344 = vunpack.c.l.b16 %v319
      %v345 = vunpack.c.l.b16 %v320
      %v346 = vpack.c.b16 %v338, %v337
      %v347 = vpack.c.b16 %v340, %v339
      %v348 = vpack.c.b16 %v342, %v341
      %v349 = vpack.c.b16 %v344, %v343
      %v350 = vpack.c.b16 %v345, %v345
      %v356 = vsel %vm242, %v327, 0
      %v359 = vsel %vm246, %v350, 0
      %361 = vmatpush.bf16.msra.mxu0 0
      %362 = vmatpush.bf16.msra.mxu0 0
      %363 = vmatpush.bf16.msra.mxu0 0
      %364 = vmatpush.bf16.msra.mxu0 %v359
      %365 = vmatpush.bf16.msra.mxu0 %v349
      %366 = vmatpush.bf16.msra.mxu0 %v348
      %367 = vmatpush.bf16.msra.mxu0 %v347
      %368 = vmatpush.bf16.msra.mxu0 %v346
      %369 = vmatmul.bf16.gmra.mxu0 %v356
      %v370 = vpop.f32.mrf.mxu0
      %v371 = vadd.f32 0.0, %v370
      %v372 = vpop.f32.mrf.mxu0
      %v373 = vadd.f32 0.0, %v372
      %374 = vdwg.mxu0
      %v375 = vadd.f32 %v306, %v371
      %v376 = vadd.f32 %v308, %v373
      %v377 = vmul.f32 %v375, 0.004208737
      %v378 = vmul.f32 %v376, 0.004208737
      %v379 = vld [vmem:[%s2] sm:$0x1]
      %v381 = vperm.slane %v379, 0
      %v383 = vadd.f32 %v377, %v381
      %v384 = vadd.f32 %v378, %v381
      %v385 = vround.ne.pseudo %v383
      %v386 = vround.ne.pseudo %v384
      %v387 = vmax.f32 %v385, -128.0
      %v388 = vmax.f32 %v386, -128.0
      %v389 = vmin.f32 %v387, 127.0
      %v390 = vmin.f32 %v388, 127.0
      %v391 = vmul.f32 %v389, 0.017024385
      %v392 = vmul.f32 %v390, 0.017024385
      %v393 = vpack.c.bf16 %v391, %v391
      %v394 = vpack.c.bf16 %v392, %v392
      %395 = vst [vmem:[%s170] sm:$0xf] %v393
      %396 = vst [vmem:[%s170 + $0x4] sm:$0xf] %v394
      %p397 = scmp.lt.s32.totalorder %s14, 1
      %s398 = scalar_select %p397, %s14, 1
      %s399 = smul.addr %s398, 2
      %s400 = smul.addr %s399, 4
      %s401 = scalar_lea.vmem %s3, %s400
      // Predicated region
      $region33: #{forward.1} parent=31 // pred_check
        %p402 = pneg %p100
      $region34: #{forward.1} parent=31 // pred_check_branch
        %404 = sbr.rel (%p402) target = $region36
      $region35: #{forward.1} parent=31 // pred_region
        _
      $region36: #{forward.1} parent=31 // pred_fallthru
        _
    $region32: #{forward.1} parent=5 // pred_fallthru
      _
    %p405 = scmp.le.s32.totalorder 2, %s9
    // Predicated region
    $region37: #{forward.1} parent=5 // pred_check
      %p406 = pneg %p405
    $region38: #{forward.1} parent=5 // pred_check_branch
      %408 = sbr.rel (%p406) target = $region40
    $region39: #{forward.1} parent=5 // pred_region
      %s409 = ssub.s32 %s9, 2
      // Predicated region
      $region41: #{forward.1} parent=39 // pred_check
        %p410 = pneg %p106
      $region42: #{forward.1} parent=39 // pred_check_branch
        %412 = sbr.rel (%p410) target = $region44
      $region43: #{forward.1} parent=39 // pred_region
        %p413 = scmp.lt.s32.totalorder %s15, 1
        %s414 = scalar_select %p413, %s15, 1
        %s415 = smul.addr %s414, 2
        %s416 = smul.addr %s415, 4
        %s417 = scalar_lea.vmem %s3, %s416
      $region44: #{forward.1} parent=39 // pred_fallthru
        _
    $region40: #{forward.1} parent=5 // pred_fallthru
      _
  $region6: #{forward.1} parent=0 // loop_footer
    %s13 = sadd.s32 1, %s9
  $region7: #{forward.1} parent=0 // loop_footer_branch
    %8 = sbr.rel target = $region3
  $region8: #{forward.1} parent=0 // loop_exit
    _

</llo_original>
